<compile_context>
chip_gen: v6e
topology: v6e:2x2x1
jax: 0.10.0
libtpu: 0.0.40
codegen_flags: <defaults>
</compile_context>

<pallas_src>
import jax
import jax.numpy as jnp
from jax.experimental import pallas as pl
from jax.experimental.pallas import tpu as pltpu


def _sqnl(x):
    # SqNL activation:
    #   x >  2        ->  1
    #   0 <= x <= 2   ->  x - x^2/4
    #  -2 <= x <  0   ->  x + x^2/4
    #   x < -2        -> -1
    x2 = x * x * 0.25
    return jnp.where(
        x > 2.0, 1.0,
        jnp.where(
            x >= 0.0, x - x2,
            jnp.where(x >= -2.0, x + x2, -1.0),
        ),
    )


def mlp_kernel(x_ref, w1_ref, b1_ref, w23_ref, b23_ref, o_ref):
    x = x_ref[...]                                                    # (TB, 784)
    h1 = jnp.dot(x, w1_ref[...],
                 preferred_element_type=jnp.float32) + b1_ref[...]    # (TB, 10)
    a1 = _sqnl(h1)
    out = jnp.dot(a1, w23_ref[...],
                  preferred_element_type=jnp.float32) + b23_ref[...]  # (TB, 10)
    o_ref[...] = out.astype(o_ref.dtype)


def simple_nn_forward(x, params, *, tb_max=1024):
    """x: (B, 1, 28, 28) or (B, 784) float32. Returns (B, 10) float32."""
    w1, b1, w2, b2, w3, b3 = params

    # Glue: x.view(-1, 784)
    xf = x.reshape(-1, 28 * 28).astype(jnp.float32)
    B = xf.shape[0]

    # Fuse the activation-free layers 2 and 3 (exact up to rounding order):
    #   h3 = (a1 @ w2 + b2) @ w3 + b3 = a1 @ w23 + b23.
    w23 = jnp.dot(w2, w3)                      # (10, 10)
    b23 = jnp.dot(b2, w3) + b3                 # (1, 10)

    # Batch tile: multiple of 8, capped by tb_max, and chosen so the grid has
    # at least 2 steps whenever B allows it (lets v7x shard across both TCs).
    half = (B + 1) // 2
    TB = min(tb_max, max(8, ((half + 7) // 8) * 8))
    grid = (pl.cdiv(B, TB),)                   # ragged last tile handled by Pallas

    def const2d(shape):
        return pl.BlockSpec(shape, lambda i: (0, 0))

    cost = pl.CostEstimate(
        flops=2 * B * 784 * 10 + 2 * B * 10 * 10 + 4 * B * 10,
        transcendentals=0,
        bytes_accessed=(B * 784 * 4 + B * 10 * 4
                        + (784 * 10 + 10 + 10 * 10 + 10) * 4),
    )

    out = pl.pallas_call(
        mlp_kernel,
        out_shape=jax.ShapeDtypeStruct((B, 10), jnp.float32),
        grid=grid,
        in_specs=[
            pl.BlockSpec((TB, 784), lambda i: (i, 0)),   # streamed batch tiles
            const2d(w1.shape), const2d(b1.shape),        # resident weights/biases
            const2d(w23.shape), const2d(b23.shape),
        ],
        out_specs=pl.BlockSpec((TB, 10), lambda i: (i, 0)),
        compiler_params=pltpu.CompilerParams(
            dimension_semantics=("parallel",),
        ),
        cost_estimate=cost,
    )(xf, w1, b1, w23, b23)

    return out


def init_params(key):
    """Deterministic init matching PyTorch nn.Linear default: U(-1/sqrt(in), 1/sqrt(in)).
    Weights stored as (in, out); biases as (1, out) for TPU-friendly 2D layout."""
    dims = [(28 * 28, 10), (10, 64), (64, 10)]
    params = []
    for i, (fan_in, fan_out) in enumerate(dims):
        kw, kb = jax.random.split(jax.random.fold_in(key, i))
        bound = 1.0 / jnp.sqrt(jnp.float32(fan_in))
        w = jax.random.uniform(kw, (fan_in, fan_out), jnp.float32, -bound, bound)
        b = jax.random.uniform(kb, (1, fan_out), jnp.float32, -bound, bound)
        params += [w, b]
    return tuple(params)


if __name__ == "__main__":
    key = jax.random.PRNGKey(0)
    params = init_params(key)

    # Small batch of MNIST-shaped images (NCHW), flattened inside the wrapper.
    x = jax.random.normal(jax.random.fold_in(key, 100), (8, 1, 28, 28), jnp.float32)

    out = simple_nn_forward(x, params)
    jax.block_until_ready(out)

    # Reference check in plain JAX using the UNFUSED original math.
    xf = x.reshape(-1, 28 * 28)
    w1, b1, w2, b2, w3, b3 = params
    ref = _sqnl(xf @ w1 + b1) @ w2 + b2
    ref = ref @ w3 + b3
    assert out.shape == (8, 10)
    assert jnp.allclose(out, ref, atol=1e-4, rtol=1e-4)

    print("KERNEL_OK")
</pallas_src>

<mosaic_0001>
module attributes {stable_mosaic.version = 11 : i64} {
  func.func @mlp_kernel(%arg0: i32, %arg1: memref<8x784xf32, #tpu.memory_space<vmem>>, %arg2: memref<784x10xf32, #tpu.memory_space<vmem>>, %arg3: memref<1x10xf32, #tpu.memory_space<vmem>>, %arg4: memref<10x10xf32, #tpu.memory_space<vmem>>, %arg5: memref<1x10xf32, #tpu.memory_space<vmem>>, %arg6: memref<8x10xf32, #tpu.memory_space<vmem>>) attributes {dimension_semantics = [#tpu.dimension_semantics<parallel>], iteration_bounds = array<i64: 1>, scalar_prefetch = 0 : i64, scratch_operands = 0 : i64, tpu.core_type = #tpu.core_type<tc>, window_params = [{transform_indices = @transform_0, window_bounds = array<i64: 8, 784>}, {pipeline_mode = #tpu.pipeline_mode<synchronous>, transform_indices = @transform_1, window_bounds = array<i64: 784, 10>}, {pipeline_mode = #tpu.pipeline_mode<synchronous>, transform_indices = @transform_2, window_bounds = array<i64: 1, 10>}, {pipeline_mode = #tpu.pipeline_mode<synchronous>, transform_indices = @transform_3, window_bounds = array<i64: 10, 10>}, {pipeline_mode = #tpu.pipeline_mode<synchronous>, transform_indices = @transform_4, window_bounds = array<i64: 1, 10>}, {transform_indices = @transform_5, window_bounds = array<i64: 8, 10>}]} {
    %c0 = arith.constant 0 : index
    %c0_0 = arith.constant 0 : index
    %0 = vector.load %arg1[%c0, %c0_0] : memref<8x784xf32, #tpu.memory_space<vmem>>, vector<8x784xf32>
    %c0_1 = arith.constant 0 : index
    %c0_2 = arith.constant 0 : index
    %1 = vector.load %arg2[%c0_1, %c0_2] : memref<784x10xf32, #tpu.memory_space<vmem>>, vector<784x10xf32>
    %cst = arith.constant dense<0.000000e+00> : vector<8x10xf32>
    %2 = tpu.matmul %0, %1, %cst {dimension_numbers = #tpu.dot_dimension_numbers<[1], [0], [0], [1], [0, 0, 1, 1], [], []>} : vector<8x784xf32>, vector<784x10xf32>, vector<8x10xf32> -> vector<8x10xf32>
    %c0_3 = arith.constant 0 : index
    %c0_4 = arith.constant 0 : index
    %3 = vector.load %arg3[%c0_3, %c0_4] : memref<1x10xf32, #tpu.memory_space<vmem>>, vector<1x10xf32>
    %4 = vector.broadcast %3 : vector<1x10xf32> to vector<8x10xf32>
    %5 = arith.addf %2, %4 : vector<8x10xf32>
    %6 = arith.mulf %5, %5 : vector<8x10xf32>
    %cst_5 = arith.constant 2.500000e-01 : f32
    %7 = vector.broadcast %cst_5 : f32 to vector<8x10xf32>
    %8 = arith.mulf %6, %7 : vector<8x10xf32>
    %cst_6 = arith.constant 2.000000e+00 : f32
    %9 = vector.broadcast %cst_6 : f32 to vector<8x10xf32>
    %10 = arith.cmpf ogt, %5, %9 : vector<8x10xf32>
    %cst_7 = arith.constant 0.000000e+00 : f32
    %11 = vector.broadcast %cst_7 : f32 to vector<8x10xf32>
    %12 = arith.cmpf oge, %5, %11 : vector<8x10xf32>
    %13 = arith.subf %5, %8 : vector<8x10xf32>
    %cst_8 = arith.constant -2.000000e+00 : f32
    %14 = vector.broadcast %cst_8 : f32 to vector<8x10xf32>
    %15 = arith.cmpf oge, %5, %14 : vector<8x10xf32>
    %16 = arith.addf %5, %8 : vector<8x10xf32>
    %cst_9 = arith.constant -1.000000e+00 : f32
    %17 = vector.broadcast %cst_9 : f32 to vector<8x10xf32>
    %18 = arith.select %15, %16, %17 : vector<8x10xi1>, vector<8x10xf32>
    %19 = arith.select %12, %13, %18 : vector<8x10xi1>, vector<8x10xf32>
    %cst_10 = arith.constant 1.000000e+00 : f32
    %20 = vector.broadcast %cst_10 : f32 to vector<8x10xf32>
    %21 = arith.select %10, %20, %19 : vector<8x10xi1>, vector<8x10xf32>
    %c0_11 = arith.constant 0 : index
    %c0_12 = arith.constant 0 : index
    %22 = vector.load %arg4[%c0_11, %c0_12] : memref<10x10xf32, #tpu.memory_space<vmem>>, vector<10x10xf32>
    %cst_13 = arith.constant dense<0.000000e+00> : vector<8x10xf32>
    %23 = tpu.matmul %21, %22, %cst_13 {dimension_numbers = #tpu.dot_dimension_numbers<[1], [0], [0], [1], [0, 0, 1, 1], [], []>} : vector<8x10xf32>, vector<10x10xf32>, vector<8x10xf32> -> vector<8x10xf32>
    %c0_14 = arith.constant 0 : index
    %c0_15 = arith.constant 0 : index
    %24 = vector.load %arg5[%c0_14, %c0_15] : memref<1x10xf32, #tpu.memory_space<vmem>>, vector<1x10xf32>
    %25 = vector.broadcast %24 : vector<1x10xf32> to vector<8x10xf32>
    %26 = arith.addf %23, %25 : vector<8x10xf32>
    %c0_16 = arith.constant 0 : index
    %c0_17 = arith.constant 0 : index
    %27 = vector.load %arg6[%c0_16, %c0_17] : memref<8x10xf32, #tpu.memory_space<vmem>>, vector<8x10xf32>
    tpu.vector_store %arg6[%c0_16, %c0_17], %26 {strides = array<i32>} : memref<8x10xf32, #tpu.memory_space<vmem>>, vector<8x10xf32>,
    return
  }
  func.func @transform_0(%arg0: i32) -> (i32, i32) {
    %c0_i32 = arith.constant 0 : i32
    %c0_i32_0 = arith.constant 0 : i32
    return %arg0, %c0_i32 : i32, i32
  }
  func.func @transform_1(%arg0: i32) -> (i32, i32) {
    %c0_i32 = arith.constant 0 : i32
    %c0_i32_0 = arith.constant 0 : i32
    %c0_i32_1 = arith.constant 0 : i32
    return %c0_i32, %c0_i32_0 : i32, i32
  }
  func.func @transform_2(%arg0: i32) -> (i32, i32) {
    %c0_i32 = arith.constant 0 : i32
    %c0_i32_0 = arith.constant 0 : i32
    %c0_i32_1 = arith.constant 0 : i32
    return %c0_i32, %c0_i32_0 : i32, i32
  }
  func.func @transform_3(%arg0: i32) -> (i32, i32) {
    %c0_i32 = arith.constant 0 : i32
    %c0_i32_0 = arith.constant 0 : i32
    %c0_i32_1 = arith.constant 0 : i32
    return %c0_i32, %c0_i32_0 : i32, i32
  }
  func.func @transform_4(%arg0: i32) -> (i32, i32) {
    %c0_i32 = arith.constant 0 : i32
    %c0_i32_0 = arith.constant 0 : i32
    %c0_i32_1 = arith.constant 0 : i32
    return %c0_i32, %c0_i32_0 : i32, i32
  }
  func.func @transform_5(%arg0: i32) -> (i32, i32) {
    %c0_i32 = arith.constant 0 : i32
    %c0_i32_0 = arith.constant 0 : i32
    return %arg0, %c0_i32 : i32, i32
  }
}

</mosaic_0001>

<llo_original>
// kernel: tpu_custom_call.1
$region0: #{tpu_custom_call.1}
  #allocation0 [shape = 'u32[]', space=smem, size = 0x4, offset = 0x4, fixed_abs, tag = 'smem constant byte address 0x4 - core index']
  #allocation1 [shape = 'u32[144,128]{1,0:T(1,128)}', space=vmem, size = 0x12000, scoped, tag = 'internal scratch']
  %s0 = inlined_call_operand.vmem [shape: f32[8,784], index: 0, kind: input, shape index: {}]
  %s1 = inlined_call_operand.vmem [shape: f32[784,10], index: 1, kind: input, shape index: {}]
  %s2 = inlined_call_operand.vmem [shape: f32[1,10], index: 2, kind: input, shape index: {}]
  %s3 = inlined_call_operand.vmem [shape: f32[10,10], index: 3, kind: input, shape index: {}]
  %s4 = inlined_call_operand.vmem [shape: f32[1,10], index: 4, kind: input, shape index: {}]
  %s5 = inlined_call_operand.hbm [shape: f32[8,10], index: 5, kind: output, shape index: {}]
  %s6 = sld [smem:[#allocation0]]
  $region30: #{tpu_custom_call.1} parent=0
    _
  %s8 = ssub.s32 1, %s6
  %s9 = scalar_select 0, %s8, %s6
  $region1: #{tpu_custom_call.1} parent=0
    #allocation2 [shape = 'u8[4096]{0}', space=vmem, size = 0x1000, scoped, tag = 'output window, operand 0, single buffered']
    #allocation3 [shape = 's32[1]{0}', space=sflag, size = 0x4, scoped, tag = 'scoped memory for tpu_custom_call.1']
    %10 = vsyncpa [#allocation3], 0
    // Predicated region
    $region2: #{tpu_custom_call.1} parent=1 // pred_check
      _
    $region3: #{tpu_custom_call.1} parent=1 // pred_check_branch
      %12 = sbr.rel (0) target = $region5
    $region4: #{tpu_custom_call.1} parent=1 // pred_region
      _
    $region5: #{tpu_custom_call.1} parent=1 // pred_fallthru
      _
    // Predicated region
    $region6: #{tpu_custom_call.1} parent=1 // pred_check
      _
    $region7: #{tpu_custom_call.1} parent=1 // pred_check_branch
      %14 = sbr.rel (0) target = $region9
    $region8: #{tpu_custom_call.1} parent=1 // pred_region
      _
    $region9: #{tpu_custom_call.1} parent=1 // pred_fallthru
      _
    // Predicated region
    $region10: #{tpu_custom_call.1} parent=1 // pred_check
      _
    $region11: #{tpu_custom_call.1} parent=1 // pred_check_branch
      %16 = sbr.rel (0) target = $region13
    $region12: #{tpu_custom_call.1} parent=1 // pred_region
      _
    $region13: #{tpu_custom_call.1} parent=1 // pred_fallthru
      _
    // Predicated region
    $region14: #{tpu_custom_call.1} parent=1 // pred_check
      _
    $region15: #{tpu_custom_call.1} parent=1 // pred_check_branch
      %18 = sbr.rel (0) target = $region17
    $region16: #{tpu_custom_call.1} parent=1 // pred_region
      _
    $region17: #{tpu_custom_call.1} parent=1 // pred_fallthru
      _
    // Predicated region
    $region18: #{tpu_custom_call.1} parent=1 // pred_check
      _
    $region19: #{tpu_custom_call.1} parent=1 // pred_check_branch
      %20 = sbr.rel (0) target = $region21
    $region20: #{tpu_custom_call.1} parent=1 // pred_region
      _
    $region21: #{tpu_custom_call.1} parent=1 // pred_fallthru
      _
    %v21 = vld [vmem:[%s0] sm:$0xff]
    %v22 = vld [vmem:[%s0 + $0x8] sm:$0xff]
    %v23 = vld [vmem:[%s0 + $0x10] sm:$0xff]
    %v24 = vld [vmem:[%s0 + $0x18] sm:$0xff]
    %v25 = vld [vmem:[%s0 + $0x20] sm:$0xff]
    %v26 = vld [vmem:[%s0 + $0x28] sm:$0xff]
    %v27 = vld [vmem:[%s0 + $0x30] sm:$0xff]
    %v28 = vld [vmem:[%s1] sm:$0xff]
    %v29 = vld [vmem:[%s1 + $0x8] sm:$0xff]
    %v30 = vld [vmem:[%s1 + $0x10] sm:$0xff]
    %v31 = vld [vmem:[%s1 + $0x18] sm:$0xff]
    %v32 = vld [vmem:[%s1 + $0x20] sm:$0xff]
    %v33 = vld [vmem:[%s1 + $0x28] sm:$0xff]
    %v34 = vld [vmem:[%s1 + $0x30] sm:$0xff]
    %v35 = vld [vmem:[%s1 + $0x38] sm:$0xff]
    %v36 = vld [vmem:[%s1 + $0x40] sm:$0xff]
    %v37 = vld [vmem:[%s1 + $0x48] sm:$0xff]
    %v38 = vld [vmem:[%s1 + $0x50] sm:$0xff]
    %v39 = vld [vmem:[%s1 + $0x58] sm:$0xff]
    %v40 = vld [vmem:[%s1 + $0x60] sm:$0xff]
    %v41 = vld [vmem:[%s1 + $0x68] sm:$0xff]
    %v42 = vld [vmem:[%s1 + $0x70] sm:$0xff]
    %v43 = vld [vmem:[%s1 + $0x78] sm:$0xff]
    %v44 = vld [vmem:[%s1 + $0x80] sm:$0xff]
    %v45 = vld [vmem:[%s1 + $0x88] sm:$0xff]
    %v46 = vld [vmem:[%s1 + $0x90] sm:$0xff]
    %v47 = vld [vmem:[%s1 + $0x98] sm:$0xff]
    %v48 = vld [vmem:[%s1 + $0xa0] sm:$0xff]
    %v49 = vld [vmem:[%s1 + $0xa8] sm:$0xff]
    %v50 = vld [vmem:[%s1 + $0xb0] sm:$0xff]
    %v51 = vld [vmem:[%s1 + $0xb8] sm:$0xff]
    %v52 = vld [vmem:[%s1 + $0xc0] sm:$0xff]
    %v53 = vld [vmem:[%s1 + $0xc8] sm:$0xff]
    %v54 = vld [vmem:[%s1 + $0xd0] sm:$0xff]
    %v55 = vld [vmem:[%s1 + $0xd8] sm:$0xff]
    %v56 = vld [vmem:[%s1 + $0xe0] sm:$0xff]
    %v57 = vld [vmem:[%s1 + $0xe8] sm:$0xff]
    %v58 = vld [vmem:[%s1 + $0xf0] sm:$0xff]
    %v59 = vld [vmem:[%s1 + $0xf8] sm:$0xff]
    %v60 = vld [vmem:[%s1 + $0x100] sm:$0xff]
    %v61 = vld [vmem:[%s1 + $0x108] sm:$0xff]
    %v62 = vld [vmem:[%s1 + $0x110] sm:$0xff]
    %v63 = vld [vmem:[%s1 + $0x118] sm:$0xff]
    %v64 = vld [vmem:[%s1 + $0x120] sm:$0xff]
    %v65 = vld [vmem:[%s1 + $0x128] sm:$0xff]
    %v66 = vld [vmem:[%s1 + $0x130] sm:$0xff]
    %v67 = vld [vmem:[%s1 + $0x138] sm:$0xff]
    %v68 = vld [vmem:[%s1 + $0x140] sm:$0xff]
    %v69 = vld [vmem:[%s1 + $0x148] sm:$0xff]
    %v70 = vld [vmem:[%s1 + $0x150] sm:$0xff]
    %v71 = vld [vmem:[%s1 + $0x158] sm:$0xff]
    %v72 = vld [vmem:[%s1 + $0x160] sm:$0xff]
    %v73 = vld [vmem:[%s1 + $0x168] sm:$0xff]
    %v74 = vld [vmem:[%s1 + $0x170] sm:$0xff]
    %v75 = vld [vmem:[%s1 + $0x178] sm:$0xff]
    %v76 = vld [vmem:[%s1 + $0x180] sm:$0xff]
    %v77 = vld [vmem:[%s1 + $0x188] sm:$0xff]
    %v78 = vld [vmem:[%s1 + $0x190] sm:$0xff]
    %v79 = vld [vmem:[%s1 + $0x198] sm:$0xff]
    %v80 = vld [vmem:[%s1 + $0x1a0] sm:$0xff]
    %v81 = vld [vmem:[%s1 + $0x1a8] sm:$0xff]
    %v82 = vld [vmem:[%s1 + $0x1b0] sm:$0xff]
    %v83 = vld [vmem:[%s1 + $0x1b8] sm:$0xff]
    %v84 = vld [vmem:[%s1 + $0x1c0] sm:$0xff]
    %v85 = vld [vmem:[%s1 + $0x1c8] sm:$0xff]
    %v86 = vld [vmem:[%s1 + $0x1d0] sm:$0xff]
    %v87 = vld [vmem:[%s1 + $0x1d8] sm:$0xff]
    %v88 = vld [vmem:[%s1 + $0x1e0] sm:$0xff]
    %v89 = vld [vmem:[%s1 + $0x1e8] sm:$0xff]
    %v90 = vld [vmem:[%s1 + $0x1f0] sm:$0xff]
    %v91 = vld [vmem:[%s1 + $0x1f8] sm:$0xff]
    %v92 = vld [vmem:[%s1 + $0x200] sm:$0xff]
    %v93 = vld [vmem:[%s1 + $0x208] sm:$0xff]
    %v94 = vld [vmem:[%s1 + $0x210] sm:$0xff]
    %v95 = vld [vmem:[%s1 + $0x218] sm:$0xff]
    %v96 = vld [vmem:[%s1 + $0x220] sm:$0xff]
    %v97 = vld [vmem:[%s1 + $0x228] sm:$0xff]
    %v98 = vld [vmem:[%s1 + $0x230] sm:$0xff]
    %v99 = vld [vmem:[%s1 + $0x238] sm:$0xff]
    %v100 = vld [vmem:[%s1 + $0x240] sm:$0xff]
    %v101 = vld [vmem:[%s1 + $0x248] sm:$0xff]
    %v102 = vld [vmem:[%s1 + $0x250] sm:$0xff]
    %v103 = vld [vmem:[%s1 + $0x258] sm:$0xff]
    %v104 = vld [vmem:[%s1 + $0x260] sm:$0xff]
    %v105 = vld [vmem:[%s1 + $0x268] sm:$0xff]
    %v106 = vld [vmem:[%s1 + $0x270] sm:$0xff]
    %v107 = vld [vmem:[%s1 + $0x278] sm:$0xff]
    %v108 = vld [vmem:[%s1 + $0x280] sm:$0xff]
    %v109 = vld [vmem:[%s1 + $0x288] sm:$0xff]
    %v110 = vld [vmem:[%s1 + $0x290] sm:$0xff]
    %v111 = vld [vmem:[%s1 + $0x298] sm:$0xff]
    %v112 = vld [vmem:[%s1 + $0x2a0] sm:$0xff]
    %v113 = vld [vmem:[%s1 + $0x2a8] sm:$0xff]
    %v114 = vld [vmem:[%s1 + $0x2b0] sm:$0xff]
    %v115 = vld [vmem:[%s1 + $0x2b8] sm:$0xff]
    %v116 = vld [vmem:[%s1 + $0x2c0] sm:$0xff]
    %v117 = vld [vmem:[%s1 + $0x2c8] sm:$0xff]
    %v118 = vld [vmem:[%s1 + $0x2d0] sm:$0xff]
    %v119 = vld [vmem:[%s1 + $0x2d8] sm:$0xff]
    %v120 = vld [vmem:[%s1 + $0x2e0] sm:$0xff]
    %v121 = vld [vmem:[%s1 + $0x2e8] sm:$0xff]
    %v122 = vld [vmem:[%s1 + $0x2f0] sm:$0xff]
    %v123 = vld [vmem:[%s1 + $0x2f8] sm:$0xff]
    %v124 = vld [vmem:[%s1 + $0x300] sm:$0xff]
    %v125 = vld [vmem:[%s1 + $0x308] sm:$0xff]
    %v126 = vld [vmem:[%s2] sm:$0x1]
    %v128 = vlaneseq
    %v129 = vshrl.u32 %v128, 7
    %v130 = vsub.s32 0, %v129
    %v131 = vrot.slane %v126, %v130
    %vm133 = vcmask 130048
    %v135 = vsel %vm133, %v27, 0
    %137 = vmatprep.subr.mxu0 0.0
    %138 = vmatpush1.msra.mxu0 %v43
    %139 = vmatprep.subr.mxu0 0.0
    %140 = vmatpush1.msra.mxu0 %v42
    %141 = vmatprep.subr.mxu0 0.0
    %142 = vmatpush1.msra.mxu0 %v41
    %143 = vmatprep.subr.mxu0 0.0
    %144 = vmatpush1.msra.mxu0 %v40
    %145 = vmatprep.subr.mxu0 0.0
    %146 = vmatpush1.msra.mxu0 %v39
    %147 = vmatprep.subr.mxu0 0.0
    %148 = vmatpush1.msra.mxu0 %v38
    %149 = vmatprep.subr.mxu0 0.0
    %150 = vmatpush1.msra.mxu0 %v37
    %151 = vmatprep.subr.mxu0 0.0
    %152 = vmatpush1.msra.mxu0 %v36
    %153 = vmatprep.subr.mxu0 0.0
    %154 = vmatpush1.msra.mxu0 %v35
    %155 = vmatprep.subr.mxu0 0.0
    %156 = vmatpush1.msra.mxu0 %v34
    %157 = vmatprep.subr.mxu0 0.0
    %158 = vmatpush1.msra.mxu0 %v33
    %159 = vmatprep.subr.mxu0 0.0
    %160 = vmatpush1.msra.mxu0 %v32
    %161 = vmatprep.subr.mxu0 0.0
    %162 = vmatpush1.msra.mxu0 %v31
    %163 = vmatprep.subr.mxu0 0.0
    %164 = vmatpush1.msra.mxu0 %v30
    %165 = vmatprep.subr.mxu0 0.0
    %166 = vmatpush1.msra.mxu0 %v29
    %167 = vmatprep.subr.mxu0 0.0
    %168 = vmatpush1.msra.mxu0 %v28
    %169 = vmatprep.subr.mxu0 0.0
    %170 = vmatpush2.msra.mxu0 %v59
    %171 = vmatprep.subr.mxu0 0.0
    %172 = vmatpush2.msra.mxu0 %v58
    %173 = vmatprep.subr.mxu0 0.0
    %174 = vmatpush2.msra.mxu0 %v57
    %175 = vmatprep.subr.mxu0 0.0
    %176 = vmatpush2.msra.mxu0 %v56
    %177 = vmatprep.subr.mxu0 0.0
    %178 = vmatpush2.msra.mxu0 %v55
    %179 = vmatprep.subr.mxu0 0.0
    %180 = vmatpush2.msra.mxu0 %v54
    %181 = vmatprep.subr.mxu0 0.0
    %182 = vmatpush2.msra.mxu0 %v53
    %183 = vmatprep.subr.mxu0 0.0
    %184 = vmatpush2.msra.mxu0 %v52
    %185 = vmatprep.subr.mxu0 0.0
    %186 = vmatpush2.msra.mxu0 %v51
    %187 = vmatprep.subr.mxu0 0.0
    %188 = vmatpush2.msra.mxu0 %v50
    %189 = vmatprep.subr.mxu0 0.0
    %190 = vmatpush2.msra.mxu0 %v49
    %191 = vmatprep.subr.mxu0 0.0
    %192 = vmatpush2.msra.mxu0 %v48
    %193 = vmatprep.subr.mxu0 0.0
    %194 = vmatpush2.msra.mxu0 %v47
    %195 = vmatprep.subr.mxu0 0.0
    %196 = vmatpush2.msra.mxu0 %v46
    %197 = vmatprep.subr.mxu0 0.0
    %198 = vmatpush2.msra.mxu0 %v45
    %199 = vmatprep.subr.mxu0 0.0
    %200 = vmatpush2.msra.mxu0 %v44
    %201 = vmatprep.mubr.f32.mxu0 %v22
    %202 = vmatmul.mubr.f32.gmra.mxu0 %v21
    %v203 = vpop.f32.mrf.mxu0
    %v204 = vadd.f32 %v131, %v203
    %v205 = vpop.f32.mrf.mxu0
    %206 = vdwg.mxu0
    %207 = vmatprep.subr.mxu0 0.0
    %208 = vmatpush1.msra.mxu0 %v75
    %209 = vmatprep.subr.mxu0 0.0
    %210 = vmatpush1.msra.mxu0 %v74
    %211 = vmatprep.subr.mxu0 0.0
    %212 = vmatpush1.msra.mxu0 %v73
    %213 = vmatprep.subr.mxu0 0.0
    %214 = vmatpush1.msra.mxu0 %v72
    %215 = vmatprep.subr.mxu0 0.0
    %216 = vmatpush1.msra.mxu0 %v71
    %217 = vmatprep.subr.mxu0 0.0
    %218 = vmatpush1.msra.mxu0 %v70
    %219 = vmatprep.subr.mxu0 0.0
    %220 = vmatpush1.msra.mxu0 %v69
    %221 = vmatprep.subr.mxu0 0.0
    %222 = vmatpush1.msra.mxu0 %v68
    %223 = vmatprep.subr.mxu0 0.0
    %224 = vmatpush1.msra.mxu0 %v67
    %225 = vmatprep.subr.mxu0 0.0
    %226 = vmatpush1.msra.mxu0 %v66
    %227 = vmatprep.subr.mxu0 0.0
    %228 = vmatpush1.msra.mxu0 %v65
    %229 = vmatprep.subr.mxu0 0.0
    %230 = vmatpush1.msra.mxu0 %v64
    %231 = vmatprep.subr.mxu0 0.0
    %232 = vmatpush1.msra.mxu0 %v63
    %233 = vmatprep.subr.mxu0 0.0
    %234 = vmatpush1.msra.mxu0 %v62
    %235 = vmatprep.subr.mxu0 0.0
    %236 = vmatpush1.msra.mxu0 %v61
    %237 = vmatprep.subr.mxu0 0.0
    %238 = vmatpush1.msra.mxu0 %v60
    %239 = vmatprep.subr.mxu0 0.0
    %240 = vmatpush2.msra.mxu0 %v91
    %241 = vmatprep.subr.mxu0 0.0
    %242 = vmatpush2.msra.mxu0 %v90
    %243 = vmatprep.subr.mxu0 0.0
    %244 = vmatpush2.msra.mxu0 %v89
    %245 = vmatprep.subr.mxu0 0.0
    %246 = vmatpush2.msra.mxu0 %v88
    %247 = vmatprep.subr.mxu0 0.0
    %248 = vmatpush2.msra.mxu0 %v87
    %249 = vmatprep.subr.mxu0 0.0
    %250 = vmatpush2.msra.mxu0 %v86
    %251 = vmatprep.subr.mxu0 0.0
    %252 = vmatpush2.msra.mxu0 %v85
    %253 = vmatprep.subr.mxu0 0.0
    %254 = vmatpush2.msra.mxu0 %v84
    %255 = vmatprep.subr.mxu0 0.0
    %256 = vmatpush2.msra.mxu0 %v83
    %257 = vmatprep.subr.mxu0 0.0
    %258 = vmatpush2.msra.mxu0 %v82
    %259 = vmatprep.subr.mxu0 0.0
    %260 = vmatpush2.msra.mxu0 %v81
    %261 = vmatprep.subr.mxu0 0.0
    %262 = vmatpush2.msra.mxu0 %v80
    %263 = vmatprep.subr.mxu0 0.0
    %264 = vmatpush2.msra.mxu0 %v79
    %265 = vmatprep.subr.mxu0 0.0
    %266 = vmatpush2.msra.mxu0 %v78
    %267 = vmatprep.subr.mxu0 0.0
    %268 = vmatpush2.msra.mxu0 %v77
    %269 = vmatprep.subr.mxu0 0.0
    %270 = vmatpush2.msra.mxu0 %v76
    %271 = vmatprep.mubr.f32.mxu0 %v24
    %272 = vmatmul.mubr.f32.gmra.mxu0 %v23
    %v273 = vpop.f32.mrf.mxu0
    %v274 = vadd.f32 %v204, %v273
    %v275 = vpop.f32.mrf.mxu0
    %276 = vdwg.mxu0
    %277 = vmatprep.subr.mxu0 0.0
    %278 = vmatpush1.msra.mxu0 %v107
    %279 = vmatprep.subr.mxu0 0.0
    %280 = vmatpush1.msra.mxu0 %v106
    %281 = vmatprep.subr.mxu0 0.0
    %282 = vmatpush1.msra.mxu0 %v105
    %283 = vmatprep.subr.mxu0 0.0
    %284 = vmatpush1.msra.mxu0 %v104
    %285 = vmatprep.subr.mxu0 0.0
    %286 = vmatpush1.msra.mxu0 %v103
    %287 = vmatprep.subr.mxu0 0.0
    %288 = vmatpush1.msra.mxu0 %v102
    %289 = vmatprep.subr.mxu0 0.0
    %290 = vmatpush1.msra.mxu0 %v101
    %291 = vmatprep.subr.mxu0 0.0
    %292 = vmatpush1.msra.mxu0 %v100
    %293 = vmatprep.subr.mxu0 0.0
    %294 = vmatpush1.msra.mxu0 %v99
    %295 = vmatprep.subr.mxu0 0.0
    %296 = vmatpush1.msra.mxu0 %v98
    %297 = vmatprep.subr.mxu0 0.0
    %298 = vmatpush1.msra.mxu0 %v97
    %299 = vmatprep.subr.mxu0 0.0
    %300 = vmatpush1.msra.mxu0 %v96
    %301 = vmatprep.subr.mxu0 0.0
    %302 = vmatpush1.msra.mxu0 %v95
    %303 = vmatprep.subr.mxu0 0.0
    %304 = vmatpush1.msra.mxu0 %v94
    %305 = vmatprep.subr.mxu0 0.0
    %306 = vmatpush1.msra.mxu0 %v93
    %307 = vmatprep.subr.mxu0 0.0
    %308 = vmatpush1.msra.mxu0 %v92
    %309 = vmatprep.subr.mxu0 0.0
    %310 = vmatpush2.msra.mxu0 %v123
    %311 = vmatprep.subr.mxu0 0.0
    %312 = vmatpush2.msra.mxu0 %v122
    %313 = vmatprep.subr.mxu0 0.0
    %314 = vmatpush2.msra.mxu0 %v121
    %315 = vmatprep.subr.mxu0 0.0
    %316 = vmatpush2.msra.mxu0 %v120
    %317 = vmatprep.subr.mxu0 0.0
    %318 = vmatpush2.msra.mxu0 %v119
    %319 = vmatprep.subr.mxu0 0.0
    %320 = vmatpush2.msra.mxu0 %v118
    %321 = vmatprep.subr.mxu0 0.0
    %322 = vmatpush2.msra.mxu0 %v117
    %323 = vmatprep.subr.mxu0 0.0
    %324 = vmatpush2.msra.mxu0 %v116
    %325 = vmatprep.subr.mxu0 0.0
    %326 = vmatpush2.msra.mxu0 %v115
    %327 = vmatprep.subr.mxu0 0.0
    %328 = vmatpush2.msra.mxu0 %v114
    %329 = vmatprep.subr.mxu0 0.0
    %330 = vmatpush2.msra.mxu0 %v113
    %331 = vmatprep.subr.mxu0 0.0
    %332 = vmatpush2.msra.mxu0 %v112
    %333 = vmatprep.subr.mxu0 0.0
    %334 = vmatpush2.msra.mxu0 %v111
    %335 = vmatprep.subr.mxu0 0.0
    %336 = vmatpush2.msra.mxu0 %v110
    %337 = vmatprep.subr.mxu0 0.0
    %338 = vmatpush2.msra.mxu0 %v109
    %339 = vmatprep.subr.mxu0 0.0
    %340 = vmatpush2.msra.mxu0 %v108
    %341 = vmatprep.mubr.f32.mxu0 %v26
    %342 = vmatmul.mubr.f32.gmra.mxu0 %v25
    %v343 = vpop.f32.mrf.mxu0
    %v344 = vadd.f32 %v274, %v343
    %v345 = vpop.f32.mrf.mxu0
    %346 = vdwg.mxu0
    %347 = vmatprep.subr.mxu0 0.0
    %348 = vmatpush1.msra.mxu0 0.0
    %349 = vmatprep.subr.mxu0 0.0
    %350 = vmatpush1.msra.mxu0 0.0
    %351 = vmatprep.subr.mxu0 0.0
    %352 = vmatpush1.msra.mxu0 0.0
    %353 = vmatprep.subr.mxu0 0.0
    %354 = vmatpush1.msra.mxu0 0.0
    %355 = vmatprep.subr.mxu0 0.0
    %356 = vmatpush1.msra.mxu0 0.0
    %357 = vmatprep.subr.mxu0 0.0
    %358 = vmatpush1.msra.mxu0 0.0
    %359 = vmatprep.subr.mxu0 0.0
    %360 = vmatpush1.msra.mxu0 0.0
    %361 = vmatprep.subr.mxu0 0.0
    %362 = vmatpush1.msra.mxu0 0.0
    %363 = vmatprep.subr.mxu0 0.0
    %364 = vmatpush1.msra.mxu0 0.0
    %365 = vmatprep.subr.mxu0 0.0
    %366 = vmatpush1.msra.mxu0 0.0
    %367 = vmatprep.subr.mxu0 0.0
    %368 = vmatpush1.msra.mxu0 0.0
    %369 = vmatprep.subr.mxu0 0.0
    %370 = vmatpush1.msra.mxu0 0.0
    %371 = vmatprep.subr.mxu0 0.0
    %372 = vmatpush1.msra.mxu0 0.0
    %373 = vmatprep.subr.mxu0 0.0
    %374 = vmatpush1.msra.mxu0 0.0
    %375 = vmatprep.subr.mxu0 0.0
    %376 = vmatpush1.msra.mxu0 %v125
    %377 = vmatprep.subr.mxu0 0.0
    %378 = vmatpush1.msra.mxu0 %v124
    %379 = vmatprep.subr.mxu0 0.0
    %380 = vmatpush2.msra.mxu0 0.0
    %381 = vmatprep.subr.mxu0 0.0
    %382 = vmatpush2.msra.mxu0 0.0
    %383 = vmatprep.subr.mxu0 0.0
    %384 = vmatpush2.msra.mxu0 0.0
    %385 = vmatprep.subr.mxu0 0.0
    %386 = vmatpush2.msra.mxu0 0.0
    %387 = vmatprep.subr.mxu0 0.0
    %388 = vmatpush2.msra.mxu0 0.0
    %389 = vmatprep.subr.mxu0 0.0
    %390 = vmatpush2.msra.mxu0 0.0
    %391 = vmatprep.subr.mxu0 0.0
    %392 = vmatpush2.msra.mxu0 0.0
    %393 = vmatprep.subr.mxu0 0.0
    %394 = vmatpush2.msra.mxu0 0.0
    %395 = vmatprep.subr.mxu0 0.0
    %396 = vmatpush2.msra.mxu0 0.0
    %397 = vmatprep.subr.mxu0 0.0
    %398 = vmatpush2.msra.mxu0 0.0
    %399 = vmatprep.subr.mxu0 0.0
    %400 = vmatpush2.msra.mxu0 0.0
    %401 = vmatprep.subr.mxu0 0.0
    %402 = vmatpush2.msra.mxu0 0.0
    %403 = vmatprep.subr.mxu0 0.0
    %404 = vmatpush2.msra.mxu0 0.0
    %405 = vmatprep.subr.mxu0 0.0
    %406 = vmatpush2.msra.mxu0 0.0
    %407 = vmatprep.subr.mxu0 0.0
    %408 = vmatpush2.msra.mxu0 0.0
    %409 = vmatprep.subr.mxu0 0.0
    %410 = vmatpush2.msra.mxu0 0.0
    %411 = vmatprep.mubr.f32.mxu0 0.0
    %412 = vmatmul.mubr.f32.gmra.mxu0 %v135
    %v413 = vpop.f32.mrf.mxu0
    %v414 = vadd.f32 %v344, %v413
    %v415 = vpop.f32.mrf.mxu0
    %416 = vdwg.mxu0
    %v417 = vmul.f32 %v414, %v414
    %v418 = vmul.f32 %v417, 0.25
    %vm419 = vcmp.gt.f32.partialorder %v414, 2.0
    %vm420 = vcmp.ge.f32.partialorder %v414, 0.0
    %v421 = vsub.f32 %v414, %v418
    %vm422 = vcmp.ge.f32.partialorder %v414, -2.0
    %v423 = vadd.f32 %v414, %v418
    %v424 = vsel %vm422, %v423, -1.0
    %v425 = vsel %vm420, %v421, %v424
    %v426 = vsel %vm419, 1.0, %v425
    %v427 = vld [vmem:[%s3] sm:$0xff]
    %v428 = vld [vmem:[%s3 + $0x8] sm:$0x3]
    %v429 = vld [vmem:[%s4] sm:$0x1]
    %v431 = vlaneseq
    %v432 = vshrl.u32 %v431, 7
    %v433 = vsub.s32 0, %v432
    %v434 = vrot.slane %v429, %v433
    %vm436 = vcmask 80896
    %v438 = vsel %vm436, %v426, 0
    %vm440 = vcmask 1041408
    %v442 = vsel %vm440, %v428, 0
    %444 = vmatprep.subr.mxu0 0.0
    %445 = vmatpush1.msra.mxu0 0.0
    %446 = vmatprep.subr.mxu0 0.0
    %447 = vmatpush1.msra.mxu0 0.0
    %448 = vmatprep.subr.mxu0 0.0
    %449 = vmatpush1.msra.mxu0 0.0
    %450 = vmatprep.subr.mxu0 0.0
    %451 = vmatpush1.msra.mxu0 0.0
    %452 = vmatprep.subr.mxu0 0.0
    %453 = vmatpush1.msra.mxu0 0.0
    %454 = vmatprep.subr.mxu0 0.0
    %455 = vmatpush1.msra.mxu0 0.0
    %456 = vmatprep.subr.mxu0 0.0
    %457 = vmatpush1.msra.mxu0 0.0
    %458 = vmatprep.subr.mxu0 0.0
    %459 = vmatpush1.msra.mxu0 0.0
    %460 = vmatprep.subr.mxu0 0.0
    %461 = vmatpush1.msra.mxu0 0.0
    %462 = vmatprep.subr.mxu0 0.0
    %463 = vmatpush1.msra.mxu0 0.0
    %464 = vmatprep.subr.mxu0 0.0
    %465 = vmatpush1.msra.mxu0 0.0
    %466 = vmatprep.subr.mxu0 0.0
    %467 = vmatpush1.msra.mxu0 0.0
    %468 = vmatprep.subr.mxu0 0.0
    %469 = vmatpush1.msra.mxu0 0.0
    %470 = vmatprep.subr.mxu0 0.0
    %471 = vmatpush1.msra.mxu0 0.0
    %472 = vmatprep.subr.mxu0 0.0
    %473 = vmatpush1.msra.mxu0 %v442
    %474 = vmatprep.subr.mxu0 0.0
    %475 = vmatpush1.msra.mxu0 %v427
    %476 = vmatprep.subr.mxu0 0.0
    %477 = vmatpush2.msra.mxu0 0.0
    %478 = vmatprep.subr.mxu0 0.0
    %479 = vmatpush2.msra.mxu0 0.0
    %480 = vmatprep.subr.mxu0 0.0
    %481 = vmatpush2.msra.mxu0 0.0
    %482 = vmatprep.subr.mxu0 0.0
    %483 = vmatpush2.msra.mxu0 0.0
    %484 = vmatprep.subr.mxu0 0.0
    %485 = vmatpush2.msra.mxu0 0.0
    %486 = vmatprep.subr.mxu0 0.0
    %487 = vmatpush2.msra.mxu0 0.0
    %488 = vmatprep.subr.mxu0 0.0
    %489 = vmatpush2.msra.mxu0 0.0
    %490 = vmatprep.subr.mxu0 0.0
    %491 = vmatpush2.msra.mxu0 0.0
    %492 = vmatprep.subr.mxu0 0.0
    %493 = vmatpush2.msra.mxu0 0.0
    %494 = vmatprep.subr.mxu0 0.0
    %495 = vmatpush2.msra.mxu0 0.0
    %496 = vmatprep.subr.mxu0 0.0
    %497 = vmatpush2.msra.mxu0 0.0
    %498 = vmatprep.subr.mxu0 0.0
    %499 = vmatpush2.msra.mxu0 0.0
    %500 = vmatprep.subr.mxu0 0.0
    %501 = vmatpush2.msra.mxu0 0.0
    %502 = vmatprep.subr.mxu0 0.0
    %503 = vmatpush2.msra.mxu0 0.0
    %504 = vmatprep.subr.mxu0 0.0
    %505 = vmatpush2.msra.mxu0 0.0
    %506 = vmatprep.subr.mxu0 0.0
    %507 = vmatpush2.msra.mxu0 0.0
    %508 = vmatprep.mubr.f32.mxu0 0.0
    %509 = vmatmul.mubr.f32.gmra.mxu0 %v438
    %v510 = vpop.f32.mrf.mxu0
    %v511 = vadd.f32 %v434, %v510
    %v512 = vpop.f32.mrf.mxu0
    %513 = vdwg.mxu0
    %514 = vst.msk [vmem:[#allocation2] sm:$0xff] %vm436, %v511
    // Predicated region
    $region22: #{tpu_custom_call.1} parent=1 // pred_check
      _
    $region23: #{tpu_custom_call.1} parent=1 // pred_check_branch
      %516 = sbr.rel (0) target = $region25
    $region24: #{tpu_custom_call.1} parent=1 // pred_region
      %s518 = ssub.s32 128, 128
      %519 = vsyncadd [#allocation3], %s518
      %s521 = sshll.u32 [#allocation2], 4
      %s522 = int_to_ptr.vmem [resolvable:$true] %s521
      %524 = dma.vmem_to_hbm [thread:$0]  %s522, 128, %s5, [#allocation3]
    $region25: #{tpu_custom_call.1} parent=1 // pred_fallthru
      _
    // Predicated region
    $region26: #{tpu_custom_call.1} parent=1 // pred_check
      _
    $region27: #{tpu_custom_call.1} parent=1 // pred_check_branch
      %526 = sbr.rel (0) target = $region29
    $region28: #{tpu_custom_call.1} parent=1 // pred_region
      %527 = dma.done [#allocation3], 128
    $region29: #{tpu_custom_call.1} parent=1 // pred_fallthru
      _
    %528 = vsyncpa [#allocation3], 1

</llo_original>
